<compile_context>
chip_gen: v5e
topology: v5e:2x2
jax: 0.10.0
libtpu: 0.0.40
codegen_flags: <defaults>
</compile_context>

<pallas_src>
import functools

import jax
import jax.numpy as jnp
from jax import lax
from jax.experimental import pallas as pl
from jax.experimental.pallas import tpu as pltpu

LANE = 128
SUBLANE = 8
_VMEM_BUDGET = 20 * 1024 * 1024   # per-call working-set target (fits every gen)
_VMEM_LIMIT = 32 * 1024 * 1024    # scoped-VMEM limit requested from Mosaic
_TM_CAP = 1024                    # batch-tile cap (per review, 1024-2048 is fine)


def _round_up(x, m):
    return ((x + m - 1) // m) * m


def _choose_tile_m(batch, h, l_pad, in_bytes, out_bytes):
    """Largest batch tile (multiple of 8, <= _TM_CAP) whose double-buffered
    x/logits/labels/nll blocks plus the single-buffered weight fit in budget."""
    weight_bytes = l_pad * h * in_bytes + l_pad * 4            # w (Buffered(1)) + bias
    per_row = 2 * (h * in_bytes + l_pad * out_bytes + 4 + 4)   # x, logits, labels, nll
    tm = (_VMEM_BUDGET - weight_bytes) // max(per_row, 1)
    tm = max(SUBLANE, (tm // SUBLANE) * SUBLANE)
    tm = min(tm, _TM_CAP, _round_up(max(batch, 1), SUBLANE))
    return tm


# ----------------------------- kernel bodies ---------------------------------

def _linear_kernel(x_ref, w_ref, b_ref, out_ref):
    # logits = x @ W^T + b ; W kept as (L_pad, H), contract H directly so no
    # transpose is ever materialized.  Accumulate in f32 on the MXU.
    acc = lax.dot_general(
        x_ref[...], w_ref[...],
        dimension_numbers=(((1,), (1,)), ((), ())),
        preferred_element_type=jnp.float32)
    out_ref[...] = (acc + b_ref[...]).astype(out_ref.dtype)


def _fused_linear_ce_kernel(x_ref, w_ref, b_ref, labels_ref,
                            logits_ref, nll_ref,
                            *, num_labels, batch, tile_m):
    step = pl.program_id(0)

    # ---- linear (MXU), f32 accumulation ----
    logits = lax.dot_general(
        x_ref[...], w_ref[...],
        dimension_numbers=(((1,), (1,)), ((), ())),
        preferred_element_type=jnp.float32) + b_ref[...]          # (TM, L_pad) f32
    logits_ref[...] = logits.astype(logits_ref.dtype)

    # ---- cross entropy, f32, masked to the real num_labels columns ----
    labels = labels_ref[...]                                       # (TM, 1) i32
    classes = lax.broadcasted_iota(jnp.int32, logits.shape, 1)     # (TM, L_pad)
    valid_col = classes < num_labels
    masked = jnp.where(valid_col, logits, jnp.float32(-1e30))
    m = jnp.max(masked, axis=-1, keepdims=True)                    # (TM, 1)
    ex = jnp.exp(masked - m)              # padded lanes underflow to exactly 0
    lse = jnp.log(jnp.sum(ex, axis=-1, keepdims=True)) + m         # (TM, 1)
    picked = jnp.sum(jnp.where(classes == labels, logits, 0.0),
                     axis=-1, keepdims=True)                       # (TM, 1)
    nll = lse - picked                                             # (TM, 1)

    # Zero out padded batch rows; the mean is taken outside the kernel.
    row = lax.broadcasted_iota(jnp.int32, nll.shape, 0) + step * tile_m
    nll_ref[...] = jnp.where(row < batch, nll, 0.0)


# ----------------------------- wrapper ----------------------------------------

def _pad_params(w, b, compute_dtype):
    """Pad (L, H) weight / (L,) bias to a lane-dense L_pad = multiple of 128."""
    L, H = w.shape
    L_pad = _round_up(max(L, LANE), LANE)
    w_pad = jnp.zeros((L_pad, H), compute_dtype).at[:L, :].set(
        w.astype(compute_dtype))
    b_pad = jnp.zeros((1, L_pad), jnp.float32).at[0, :L].set(
        b.astype(jnp.float32))
    return w_pad, b_pad


def linear_net_forward(params, bias_features, labels=None, return_padded=False):
    """Mirrors LinearNet.forward(labels, bias_features)."""
    w, b = params
    B, H = bias_features.shape
    L = w.shape[0]

    # Follow the producer's dtype: bf16 callers get bf16 MXU operands and bf16
    # logits writeback (no standalone f32->bf16 pass in the wrapper); f32 stays
    # exact.  CE math and matmul accumulation are always f32 in-kernel.
    compute_dtype = bias_features.dtype
    out_dtype = bias_features.dtype
    in_bytes = jnp.dtype(compute_dtype).itemsize
    out_bytes = jnp.dtype(out_dtype).itemsize

    w_pad, b_pad = _pad_params(w, b, compute_dtype)
    L_pad = w_pad.shape[0]

    tm = _choose_tile_m(B, H, L_pad, in_bytes, out_bytes)
    B_pad = _round_up(B, tm)
    x = bias_features
    if B_pad != B:
        x = jnp.zeros((B_pad, H), x.dtype).at[:B, :].set(x)
    grid = (B_pad // tm,)

    x_spec = pl.BlockSpec((tm, H), lambda i: (i, 0))
    # Grid-invariant operands: single-buffered (second buffer is pure VMEM waste).
    w_spec = pl.BlockSpec((L_pad, H), lambda i: (0, 0),
                          pipeline_mode=pl.Buffered(1))
    b_spec = pl.BlockSpec((1, L_pad), lambda i: (0, 0),
                          pipeline_mode=pl.Buffered(1))
    logits_spec = pl.BlockSpec((tm, L_pad), lambda i: (i, 0))

    cparams = pltpu.CompilerParams(
        dimension_semantics=("parallel",),   # fully independent batch tiles
        vmem_limit_bytes=_VMEM_LIMIT)

    if labels is None:
        logits_pad = pl.pallas_call(
            _linear_kernel,
            out_shape=jax.ShapeDtypeStruct((B_pad, L_pad), out_dtype),
            grid_spec=pltpu.PrefetchScalarGridSpec(
                num_scalar_prefetch=0,
                grid=grid,
                in_specs=[x_spec, w_spec, b_spec],
                out_specs=logits_spec),
            compiler_params=cparams,
        )(x, w_pad, b_pad)
        if return_padded:
            return logits_pad                       # consumer indexes lanes 0..L-1
        return logits_pad[:B, :L]

    labels_i32 = labels.astype(jnp.int32).reshape(B, 1)
    if B_pad != B:
        labels_i32 = jnp.zeros((B_pad, 1), jnp.int32).at[:B, :].set(labels_i32)
    labels_spec = pl.BlockSpec((tm, 1), lambda i: (i, 0))
    nll_spec = pl.BlockSpec((tm, 1), lambda i: (i, 0))

    kernel = functools.partial(
        _fused_linear_ce_kernel, num_labels=L, batch=B, tile_m=tm)

    logits_pad, nll_pad = pl.pallas_call(
        kernel,
        out_shape=(jax.ShapeDtypeStruct((B_pad, L_pad), out_dtype),
                   jax.ShapeDtypeStruct((B_pad, 1), jnp.float32)),
        grid_spec=pltpu.PrefetchScalarGridSpec(
            num_scalar_prefetch=0,
            grid=grid,
            in_specs=[x_spec, w_spec, b_spec, labels_spec],
            out_specs=(logits_spec, nll_spec)),
        compiler_params=cparams,
    )(x, w_pad, b_pad, labels_i32)

    # Tiny (B_pad floats) reduction outside the kernel -> keeps the grid parallel.
    loss = jnp.sum(nll_pad) / jnp.float32(B)
    logits = logits_pad if return_padded else logits_pad[:B, :L]
    return logits, loss


# ----------------------------- main -------------------------------------------

if __name__ == "__main__":
    # Small, deterministic instantiation of LinearNet(input_size=128, num_labels=3)
    B, H, L = 8, 128, 3
    key = jax.random.PRNGKey(0)
    kx, kw, kb, kl = jax.random.split(key, 4)

    bias_features = jax.random.normal(kx, (B, H), dtype=jnp.float32)
    # nn.Linear-style init (uniform in +/- 1/sqrt(H)), deterministic
    bound = 1.0 / jnp.sqrt(jnp.float32(H))
    w = jax.random.uniform(kw, (L, H), minval=-bound, maxval=bound, dtype=jnp.float32)
    b = jax.random.uniform(kb, (L,), minval=-bound, maxval=bound, dtype=jnp.float32)
    labels = jax.random.randint(kl, (B,), 0, L, dtype=jnp.int32)

    # Pure-JAX reference
    ref_logits = bias_features @ w.T + b
    ref_logp = jax.nn.log_softmax(ref_logits, axis=-1)
    ref_loss = -jnp.mean(ref_logp[jnp.arange(B), labels])

    # Path 1: labels is None -> logits only (f32, exact)
    logits = jax.block_until_ready(linear_net_forward((w, b), bias_features))

    # Path 2: with labels -> (logits, loss), fused single kernel (f32, exact)
    logits2, loss = linear_net_forward((w, b), bias_features, labels=labels)
    logits2 = jax.block_until_ready(logits2)
    loss = jax.block_until_ready(loss)

    assert jnp.allclose(logits, ref_logits, atol=1e-4, rtol=1e-4)
    assert jnp.allclose(logits2, ref_logits, atol=1e-4, rtol=1e-4)
    assert jnp.allclose(loss, ref_loss, atol=1e-4, rtol=1e-4)

    # Path 3: bf16 producer -> bf16 MXU operands + bf16 logits writeback,
    # CE math stays f32 (looser tolerance vs the f32 reference).
    logits_bf, loss_bf = linear_net_forward(
        (w.astype(jnp.bfloat16), b), bias_features.astype(jnp.bfloat16),
        labels=labels)
    logits_bf = jax.block_until_ready(logits_bf)
    loss_bf = jax.block_until_ready(loss_bf)
    assert jnp.allclose(logits_bf.astype(jnp.float32), ref_logits,
                        atol=3e-2, rtol=3e-2)
    assert jnp.allclose(loss_bf, ref_loss, atol=3e-2, rtol=3e-2)

    print("KERNEL_OK")
</pallas_src>

<mosaic_0001>
module attributes {stable_mosaic.version = 11 : i64} {
  func.func @_linear_kernel(%arg0: i32, %arg1: memref<8x128xf32, #tpu.memory_space<vmem>>, %arg2: memref<128x128xf32, #tpu.memory_space<vmem>>, %arg3: memref<1x128xf32, #tpu.memory_space<vmem>>, %arg4: memref<8x128xf32, #tpu.memory_space<vmem>>) attributes {dimension_semantics = [#tpu.dimension_semantics<parallel>], iteration_bounds = array<i64: 1>, scalar_prefetch = 0 : i64, scratch_operands = 0 : i64, tpu.core_type = #tpu.core_type<tc>, window_params = [{transform_indices = @transform_0, window_bounds = array<i64: 8, 128>}, {pipeline_mode = #tpu.pipeline_mode<synchronous>, transform_indices = @transform_1, window_bounds = array<i64: 128, 128>}, {pipeline_mode = #tpu.pipeline_mode<synchronous>, transform_indices = @transform_2, window_bounds = array<i64: 1, 128>}, {transform_indices = @transform_3, window_bounds = array<i64: 8, 128>}]} {
    %c0 = arith.constant 0 : index
    %c0_0 = arith.constant 0 : index
    %0 = vector.load %arg1[%c0, %c0_0] : memref<8x128xf32, #tpu.memory_space<vmem>>, vector<8x128xf32>
    %c0_1 = arith.constant 0 : index
    %c0_2 = arith.constant 0 : index
    %1 = vector.load %arg2[%c0_1, %c0_2] : memref<128x128xf32, #tpu.memory_space<vmem>>, vector<128x128xf32>
    %cst = arith.constant dense<0.000000e+00> : vector<8x128xf32>
    %2 = tpu.matmul %0, %1, %cst {dimension_numbers = #tpu.dot_dimension_numbers<[1], [1], [0], [0], [0, 0, 1, 0], [], []>} : vector<8x128xf32>, vector<128x128xf32>, vector<8x128xf32> -> vector<8x128xf32>
    %c0_3 = arith.constant 0 : index
    %c0_4 = arith.constant 0 : index
    %3 = vector.load %arg3[%c0_3, %c0_4] : memref<1x128xf32, #tpu.memory_space<vmem>>, vector<1x128xf32>
    %4 = vector.broadcast %3 : vector<1x128xf32> to vector<8x128xf32>
    %5 = arith.addf %2, %4 : vector<8x128xf32>
    %c0_5 = arith.constant 0 : index
    %c0_6 = arith.constant 0 : index
    %6 = vector.load %arg4[%c0_5, %c0_6] : memref<8x128xf32, #tpu.memory_space<vmem>>, vector<8x128xf32>
    tpu.vector_store %arg4[%c0_5, %c0_6], %5 {strides = array<i32>} : memref<8x128xf32, #tpu.memory_space<vmem>>, vector<8x128xf32>,
    return
  }
  func.func @transform_0(%arg0: i32) -> (i32, i32) {
    %c0_i32 = arith.constant 0 : i32
    %c0_i32_0 = arith.constant 0 : i32
    return %arg0, %c0_i32 : i32, i32
  }
  func.func @transform_1(%arg0: i32) -> (i32, i32) {
    %c0_i32 = arith.constant 0 : i32
    %c0_i32_0 = arith.constant 0 : i32
    %c0_i32_1 = arith.constant 0 : i32
    return %c0_i32, %c0_i32_0 : i32, i32
  }
  func.func @transform_2(%arg0: i32) -> (i32, i32) {
    %c0_i32 = arith.constant 0 : i32
    %c0_i32_0 = arith.constant 0 : i32
    %c0_i32_1 = arith.constant 0 : i32
    return %c0_i32, %c0_i32_0 : i32, i32
  }
  func.func @transform_3(%arg0: i32) -> (i32, i32) {
    %c0_i32 = arith.constant 0 : i32
    %c0_i32_0 = arith.constant 0 : i32
    return %arg0, %c0_i32 : i32, i32
  }
}

</mosaic_0001>

<llo_original>
// kernel: tpu_custom_call.1
$region0: #{tpu_custom_call.1}
  #allocation0 [shape = 'u32[]', space=smem, size = 0x4, offset = 0x4, fixed_abs, tag = 'smem constant byte address 0x4 - core index']
  #allocation1 [shape = 'u32[72,128]{1,0:T(1,128)}', space=vmem, size = 0x9000, scoped, tag = 'internal scratch']
  %s0 = inlined_call_operand.hbm [shape: f32[8,128], index: 0, kind: input, shape index: {}]
  %s1 = inlined_call_operand.hbm [shape: f32[128,128], index: 1, kind: input, shape index: {}]
  %s2 = inlined_call_operand.vmem [shape: f32[1,128], index: 2, kind: input, shape index: {}]
  %s3 = inlined_call_operand.hbm [shape: f32[8,128], index: 3, kind: output, shape index: {}]
  %s4 = sld [smem:[#allocation0]]
  $region30: #{tpu_custom_call.1} parent=0
    _
  %s6 = ssub.s32 1, %s4
  %s7 = scalar_select 0, %s6, %s4
  $region1: #{tpu_custom_call.1} parent=0
    #allocation2 [shape = 'u8[4096]{0}', space=vmem, size = 0x1000, scoped, tag = 'input window, operand 0, single buffered']
    #allocation3 [shape = 's32[1]{0}', space=sflag, size = 0x4, scoped, tag = 'scoped memory for tpu_custom_call.1']
    #allocation4 [shape = 's32[1]{0}', space=sflag, size = 0x4, scoped, tag = 'scoped memory for tpu_custom_call.1']
    #allocation5 [shape = 'u8[65536]{0}', space=vmem, size = 0x10000, scoped, tag = 'input window, operand 1, single buffered']
    #allocation6 [shape = 's32[1]{0}', space=sflag, size = 0x4, scoped, tag = 'scoped memory for tpu_custom_call.1']
    #allocation7 [shape = 'u8[4096]{0}', space=vmem, size = 0x1000, scoped, tag = 'output window, operand 0, single buffered']
    %8 = vsyncpa [#allocation3], 0
    %9 = vsyncpa [#allocation6], 0
    %10 = vsyncpa [#allocation4], 0
    // Predicated region
    $region2: #{tpu_custom_call.1} parent=1 // pred_check
      _
    $region3: #{tpu_custom_call.1} parent=1 // pred_check_branch
      %12 = sbr.rel (0) target = $region5
    $region4: #{tpu_custom_call.1} parent=1 // pred_region
      %14 = vsyncadd [#allocation3], 0
      %s16 = sshll.u32 %s0, 4
      %s17 = int_to_ptr.hbm [resolvable:$true] %s16
      %s18 = sshll.u32 [#allocation2], 4
      %s19 = int_to_ptr.vmem [resolvable:$true] %s18
      %21 = dma.hbm_to_vmem [thread:$0]  %s17, 128, %s19, [#allocation3]
    $region5: #{tpu_custom_call.1} parent=1 // pred_fallthru
      _
    // Predicated region
    $region6: #{tpu_custom_call.1} parent=1 // pred_check
      _
    $region7: #{tpu_custom_call.1} parent=1 // pred_check_branch
      %23 = sbr.rel (0) target = $region9
    $region8: #{tpu_custom_call.1} parent=1 // pred_region
      %25 = vsyncadd [#allocation6], 0
      %s26 = sshll.u32 %s1, 4
      %s27 = int_to_ptr.hbm [resolvable:$true] %s26
      %s28 = sshll.u32 [#allocation5], 4
      %s29 = int_to_ptr.vmem [resolvable:$true] %s28
      %34 = dma.hbm_to_vmem [thread:$0]  %s27, 2048, %s29, [#allocation6], 128, 128, 8
    $region9: #{tpu_custom_call.1} parent=1 // pred_fallthru
      _
    // Predicated region
    $region10: #{tpu_custom_call.1} parent=1 // pred_check
      _
    $region11: #{tpu_custom_call.1} parent=1 // pred_check_branch
      %36 = sbr.rel (0) target = $region13
    $region12: #{tpu_custom_call.1} parent=1 // pred_region
      _
    $region13: #{tpu_custom_call.1} parent=1 // pred_fallthru
      _
    // Predicated region
    $region14: #{tpu_custom_call.1} parent=1 // pred_check
      _
    $region15: #{tpu_custom_call.1} parent=1 // pred_check_branch
      %38 = sbr.rel (0) target = $region17
    $region16: #{tpu_custom_call.1} parent=1 // pred_region
      %40 = dma.done [#allocation3], 128
    $region17: #{tpu_custom_call.1} parent=1 // pred_fallthru
      _
    // Predicated region
    $region18: #{tpu_custom_call.1} parent=1 // pred_check
      _
    $region19: #{tpu_custom_call.1} parent=1 // pred_check_branch
      %42 = sbr.rel (0) target = $region21
    $region20: #{tpu_custom_call.1} parent=1 // pred_region
      %44 = dma.done [#allocation6], 2048
    $region21: #{tpu_custom_call.1} parent=1 // pred_fallthru
      _
    %v45 = vld [vmem:[#allocation2] sm:$0xff]
    %v46 = vld [vmem:[#allocation5] sm:$0xff]
    %v47 = vld [vmem:[#allocation5 + $0x8] sm:$0xff]
    %v48 = vld [vmem:[#allocation5 + $0x10] sm:$0xff]
    %v49 = vld [vmem:[#allocation5 + $0x18] sm:$0xff]
    %v50 = vld [vmem:[#allocation5 + $0x20] sm:$0xff]
    %v51 = vld [vmem:[#allocation5 + $0x28] sm:$0xff]
    %v52 = vld [vmem:[#allocation5 + $0x30] sm:$0xff]
    %v53 = vld [vmem:[#allocation5 + $0x38] sm:$0xff]
    %v54 = vld [vmem:[#allocation5 + $0x40] sm:$0xff]
    %v55 = vld [vmem:[#allocation5 + $0x48] sm:$0xff]
    %v56 = vld [vmem:[#allocation5 + $0x50] sm:$0xff]
    %v57 = vld [vmem:[#allocation5 + $0x58] sm:$0xff]
    %v58 = vld [vmem:[#allocation5 + $0x60] sm:$0xff]
    %v59 = vld [vmem:[#allocation5 + $0x68] sm:$0xff]
    %v60 = vld [vmem:[#allocation5 + $0x70] sm:$0xff]
    %v61 = vld [vmem:[#allocation5 + $0x78] sm:$0xff]
    %v62 = vld [vmem:[%s2] sm:$0x1]
    %v64 = vperm.slane %v62, 0
    %66 = vmatpush.xpose.msra.mxu0 %v61
    %67 = vmatpush.xpose.msra.mxu0 %v60
    %68 = vmatpush.xpose.msra.mxu0 %v59
    %69 = vmatpush.xpose.msra.mxu0 %v58
    %70 = vmatpush.xpose.msra.mxu0 %v57
    %71 = vmatpush.xpose.msra.mxu0 %v56
    %72 = vmatpush.xpose.msra.mxu0 %v55
    %73 = vmatpush.xpose.msra.mxu0 %v54
    %74 = vmatpush.xpose.msra.mxu0 %v53
    %75 = vmatpush.xpose.msra.mxu0 %v52
    %76 = vmatpush.xpose.msra.mxu0 %v51
    %77 = vmatpush.xpose.msra.mxu0 %v50
    %78 = vmatpush.xpose.msra.mxu0 %v49
    %79 = vmatpush.xpose.msra.mxu0 %v48
    %80 = vmatpush.xpose.msra.mxu0 %v47
    %81 = vmatpush.xpose.msra.mxu0 %v46
    %82 = vmatmul.f32.gmra.mxu0 %v45
    %v83 = vpop.f32.mrf.mxu0
    %v84 = vadd.f32 %v64, %v83
    %85 = vdwg.mxu0
    %86 = vst [vmem:[#allocation7] sm:$0xff] %v84
    // Predicated region
    $region22: #{tpu_custom_call.1} parent=1 // pred_check
      _
    $region23: #{tpu_custom_call.1} parent=1 // pred_check_branch
      %88 = sbr.rel (0) target = $region25
    $region24: #{tpu_custom_call.1} parent=1 // pred_region
      %90 = vsyncadd [#allocation4], 0
      %s92 = sshll.u32 [#allocation7], 4
      %s93 = int_to_ptr.vmem [resolvable:$true] %s92
      %s94 = sshll.u32 %s3, 4
      %s95 = int_to_ptr.hbm [resolvable:$true] %s94
      %97 = dma.vmem_to_hbm [thread:$0]  %s93, 128, %s95, [#allocation4]
    $region25: #{tpu_custom_call.1} parent=1 // pred_fallthru
      _
    // Predicated region
    $region26: #{tpu_custom_call.1} parent=1 // pred_check
      _
    $region27: #{tpu_custom_call.1} parent=1 // pred_check_branch
      %99 = sbr.rel (0) target = $region29
    $region28: #{tpu_custom_call.1} parent=1 // pred_region
      %101 = dma.done [#allocation4], 128
    $region29: #{tpu_custom_call.1} parent=1 // pred_fallthru
      _
    %102 = vsyncpa [#allocation3], 1
    %103 = vsyncpa [#allocation6], 1
    %104 = vsyncpa [#allocation4], 1

</llo_original>
